<compile_context>
chip_gen: v7x
topology: tpu7x:2x2x1
jax: 0.10.0
libtpu: 0.0.40
codegen_flags: <defaults>
</compile_context>

<pallas_src>
import functools

import jax
import jax.numpy as jnp
from jax.experimental import pallas as pl
from jax.experimental.pallas import tpu as pltpu

# ----------------------------------------------------------------------------
# Model dims (from the PyTorch module)
# ----------------------------------------------------------------------------
IN_DIM = 21
DIMS = [21, 80, 80, 40, 20, 1]          # per-layer in/out sizes
NEG_SLOPE = 0.01                        # nn.LeakyReLU default

# cpx column mapping: cpx[:, i] = -x[:, PERM[i]]
PERM = [0, 1, 2, 3, 4, 5, 9, 10, 11, 6, 7, 8, 15, 16, 17, 12, 13, 14, 18, 19, 20]


def _round_up(n, m):
    return ((n + m - 1) // m) * m


def _lrelu(h):
    # 2 VALU ops (mul + max) instead of cmp + mul + select.
    return jnp.maximum(h, NEG_SLOPE * h)


# ----------------------------------------------------------------------------
# Pallas kernel: one batch tile (feature-major) through both branches
# ----------------------------------------------------------------------------
def _network_kernel(xT_ref, w1a_ref, w1b_ref, w2_ref, w3_ref, w4_ref, w5_ref,
                    b_ref, out_ref):
    cdt = w1a_ref.dtype                              # compute dtype (bf16 or f32)
    x = xT_ref[...].astype(cdt)                      # (21, TB)

    # Biases as column vectors, broadcast along the lane (batch) axis.
    b1 = b_ref[0:80, 0:1]
    b2 = b_ref[0:80, 1:2]
    b3 = b_ref[0:40, 2:3]
    b4 = b_ref[0:20, 3:4]

    def layer(w_ref, h, b):
        # (out, in) @ (in, TB) -> (out, TB); f32 accumulation on the MXU.
        acc = jnp.dot(w_ref[...], h, preferred_element_type=jnp.float32)
        return _lrelu(acc + b)

    # Layer 1, both branches (W1b already has the signed permutation folded in;
    # both branches share bias b1).
    h_a = layer(w1a_ref, x, b1).astype(cdt)
    h_b = layer(w1b_ref, x, b1).astype(cdt)

    # Shared layers 2-4, run per branch (no concat / slice copies).
    h_a = layer(w2_ref, h_a, b2).astype(cdt)
    h_b = layer(w2_ref, h_b, b2).astype(cdt)

    h_a = layer(w3_ref, h_a, b3).astype(cdt)
    h_b = layer(w3_ref, h_b, b3).astype(cdt)

    h_a = layer(w4_ref, h_a, b4)                     # keep f32 for the difference
    h_b = layer(w4_ref, h_b, b4)

    # Final linear layer: bias b5 cancels in MLP(x) - MLP(cpx), so apply W5 to
    # the difference of the two branches.  Output block is lane-dense (1, TB).
    d = (h_a - h_b).astype(cdt)                      # (20, TB)
    out_ref[...] = jnp.dot(w5_ref[...], d, preferred_element_type=jnp.float32)


# ----------------------------------------------------------------------------
# Tile selection: 128-aligned, low padding waste, >= 2 steps for big batches
# ----------------------------------------------------------------------------
def _choose_tb(B, tb_max):
    tb_max = max(128, _round_up(tb_max, 128))
    Bp = _round_up(max(B, 1), 128)
    # For big batches, force at least 2 grid steps so v7x's 2 TensorCores both
    # get work; otherwise a single step avoids per-step pipeline overhead.
    min_steps = 2 if Bp >= 1024 else 1
    n_steps = max(min_steps, -(-Bp // tb_max))
    return _round_up(-(-Bp // n_steps), 128)


# ----------------------------------------------------------------------------
# Wrapper: batch tiling + pallas_call
# ----------------------------------------------------------------------------
@functools.partial(jax.jit, static_argnames=("tb",))
def network_forward(x, params, tb=2048):
    """x: float32 [B, 21]; params: dict from prepare_kernel_params. Returns [B, 1]."""
    B = x.shape[0]
    TB = _choose_tb(B, tb)
    Bp = _round_up(max(B, 1), TB)

    xT = x.T                                         # (21, B) feature-major
    if Bp != B:
        xT = jnp.pad(xT, ((0, 0), (0, Bp - B)))

    grid = (Bp // TB,)
    const2 = lambda i: (0, 0)                        # weights/biases stay resident

    in_specs = [
        pl.BlockSpec((IN_DIM, TB), lambda i: (0, i)),        # x tile (batch on lanes)
        pl.BlockSpec(params["W1aT"].shape, const2),
        pl.BlockSpec(params["W1bT"].shape, const2),
        pl.BlockSpec(params["W2T"].shape, const2),
        pl.BlockSpec(params["W3T"].shape, const2),
        pl.BlockSpec(params["W4T"].shape, const2),
        pl.BlockSpec(params["W5T"].shape, const2),
        pl.BlockSpec(params["bias"].shape, const2),
    ]

    out = pl.pallas_call(
        _network_kernel,
        grid=grid,
        in_specs=in_specs,
        out_specs=pl.BlockSpec((1, TB), lambda i: (0, i)),   # lane-dense output
        out_shape=jax.ShapeDtypeStruct((1, Bp), jnp.float32),
        compiler_params=pltpu.CompilerParams(
            dimension_semantics=("parallel",)),
    )(xT, params["W1aT"], params["W1bT"], params["W2T"], params["W3T"],
      params["W4T"], params["W5T"], params["bias"])

    return out[0, :B][:, None]                       # (B, 1)


# ----------------------------------------------------------------------------
# Parameters: raw (PyTorch-style uniform init) + kernel-ready (folded) versions
# ----------------------------------------------------------------------------
def make_raw_params(seed=0):
    key = jax.random.PRNGKey(seed)
    raw = {}
    for li in range(1, 6):
        fan_in, fan_out = DIMS[li - 1], DIMS[li]
        key, kw, kb = jax.random.split(key, 3)
        bound = 1.0 / (fan_in ** 0.5)
        raw[f"W{li}"] = jax.random.uniform(kw, (fan_in, fan_out), jnp.float32, -bound, bound)
        raw[f"b{li}"] = jax.random.uniform(kb, (fan_out,), jnp.float32, -bound, bound)
    return raw


def prepare_kernel_params(raw, compute_dtype=jnp.bfloat16):
    """Kernel-ready params.  compute_dtype=jnp.bfloat16 (fast) or jnp.float32 (exact)."""
    # Signed permutation matrix P (21x21): cpx = x @ P, i.e. P[PERM[c], c] = -1.
    P = jnp.zeros((IN_DIM, IN_DIM), jnp.float32)
    for c, src in enumerate(PERM):
        P = P.at[src, c].set(-1.0)

    W1 = raw["W1"]

    # Biases merged into one (80, 4) column table (f32; added to f32 accumulators).
    bias = jnp.zeros((80, 4), jnp.float32)
    bias = bias.at[0:80, 0].set(raw["b1"])
    bias = bias.at[0:80, 1].set(raw["b2"])
    bias = bias.at[0:40, 2].set(raw["b3"])
    bias = bias.at[0:20, 3].set(raw["b4"])
    # b5 cancels in MLP(x) - MLP(cpx) and is not needed by the kernel.

    cd = compute_dtype
    return {
        "W1aT": W1.T.astype(cd),                     # (80, 21)
        "W1bT": (P @ W1).T.astype(cd),               # (80, 21) permutation folded in
        "W2T": raw["W2"].T.astype(cd),               # (80, 80)
        "W3T": raw["W3"].T.astype(cd),               # (40, 80)
        "W4T": raw["W4"].T.astype(cd),               # (20, 40)
        "W5T": raw["W5"].T.astype(cd),               # (1, 20)
        "bias": bias,
    }


# ----------------------------------------------------------------------------
# Pure-JAX reference (mirrors the PyTorch forward exactly, f32)
# ----------------------------------------------------------------------------
def reference_forward(x, raw):
    def mlp(h):
        for li in range(1, 6):
            h = h @ raw[f"W{li}"] + raw[f"b{li}"]
            if li < 5:
                h = jnp.where(h > 0, h, NEG_SLOPE * h)
        return h

    cpx = -x[:, jnp.array(PERM)]
    return mlp(x) - mlp(cpx)


if __name__ == "__main__":
    raw = make_raw_params(seed=0)

    x_small = jax.random.normal(jax.random.PRNGKey(0), (8, IN_DIM), jnp.float32)
    x_big = jax.random.normal(jax.random.PRNGKey(1), (300, IN_DIM), jnp.float32)
    ref_small = reference_forward(x_small, raw)
    ref_big = reference_forward(x_big, raw)

    # --- f32 compute path: strict validation of the kernel structure -------
    p32 = prepare_kernel_params(raw, compute_dtype=jnp.float32)
    out = jax.block_until_ready(network_forward(x_small, p32))
    assert out.shape == (8, 1), out.shape
    assert jnp.allclose(out, ref_small, atol=1e-3, rtol=1e-3)

    out = jax.block_until_ready(network_forward(x_big, p32, tb=256))  # multi-block + padding
    assert out.shape == (300, 1), out.shape
    assert jnp.allclose(out, ref_big, atol=1e-3, rtol=1e-3)

    # --- bf16 compute path (default fast path): looser tolerance -----------
    pbf = prepare_kernel_params(raw)                 # bf16 weights / activations
    out = jax.block_until_ready(network_forward(x_small, pbf))
    assert out.shape == (8, 1), out.shape
    assert jnp.allclose(out, ref_small, atol=5e-2, rtol=5e-2)

    out = jax.block_until_ready(network_forward(x_big, pbf, tb=256))
    assert out.shape == (300, 1), out.shape
    assert jnp.allclose(out, ref_big, atol=5e-2, rtol=5e-2)

    print("KERNEL_OK")
</pallas_src>

<mosaic_0001>
module attributes {stable_mosaic.version = 11 : i64} {
  func.func @_network_kernel(%arg0: i32, %arg1: memref<21x128xf32, #tpu.memory_space<vmem>>, %arg2: memref<80x21xf32, #tpu.memory_space<vmem>>, %arg3: memref<80x21xf32, #tpu.memory_space<vmem>>, %arg4: memref<80x80xf32, #tpu.memory_space<vmem>>, %arg5: memref<40x80xf32, #tpu.memory_space<vmem>>, %arg6: memref<20x40xf32, #tpu.memory_space<vmem>>, %arg7: memref<1x20xf32, #tpu.memory_space<vmem>>, %arg8: memref<80x4xf32, #tpu.memory_space<vmem>>, %arg9: memref<1x128xf32, #tpu.memory_space<vmem>>) attributes {dimension_semantics = [#tpu.dimension_semantics<parallel>], iteration_bounds = array<i64: 1>, scalar_prefetch = 0 : i64, scratch_operands = 0 : i64, tpu.core_type = #tpu.core_type<tc>, window_params = [{transform_indices = @transform_0, window_bounds = array<i64: 21, 128>}, {pipeline_mode = #tpu.pipeline_mode<synchronous>, transform_indices = @transform_1, window_bounds = array<i64: 80, 21>}, {pipeline_mode = #tpu.pipeline_mode<synchronous>, transform_indices = @transform_2, window_bounds = array<i64: 80, 21>}, {pipeline_mode = #tpu.pipeline_mode<synchronous>, transform_indices = @transform_3, window_bounds = array<i64: 80, 80>}, {pipeline_mode = #tpu.pipeline_mode<synchronous>, transform_indices = @transform_4, window_bounds = array<i64: 40, 80>}, {pipeline_mode = #tpu.pipeline_mode<synchronous>, transform_indices = @transform_5, window_bounds = array<i64: 20, 40>}, {pipeline_mode = #tpu.pipeline_mode<synchronous>, transform_indices = @transform_6, window_bounds = array<i64: 1, 20>}, {pipeline_mode = #tpu.pipeline_mode<synchronous>, transform_indices = @transform_7, window_bounds = array<i64: 80, 4>}, {transform_indices = @transform_8, window_bounds = array<i64: 1, 128>}]} {
    %c0 = arith.constant 0 : index
    %c0_0 = arith.constant 0 : index
    %0 = vector.load %arg1[%c0, %c0_0] : memref<21x128xf32, #tpu.memory_space<vmem>>, vector<21x128xf32>
    %c0_1 = arith.constant 0 : index
    %c0_2 = arith.constant 0 : index
    %1 = vector.load %arg8[%c0_1, %c0_2] : memref<80x4xf32, #tpu.memory_space<vmem>>, vector<80x1xf32>
    %c0_3 = arith.constant 0 : index
    %c1 = arith.constant 1 : index
    %2 = vector.load %arg8[%c0_3, %c1] : memref<80x4xf32, #tpu.memory_space<vmem>>, vector<80x1xf32>
    %c0_4 = arith.constant 0 : index
    %c2 = arith.constant 2 : index
    %3 = vector.load %arg8[%c0_4, %c2] : memref<80x4xf32, #tpu.memory_space<vmem>>, vector<40x1xf32>
    %c0_5 = arith.constant 0 : index
    %c3 = arith.constant 3 : index
    %4 = vector.load %arg8[%c0_5, %c3] : memref<80x4xf32, #tpu.memory_space<vmem>>, vector<20x1xf32>
    %c0_6 = arith.constant 0 : index
    %c0_7 = arith.constant 0 : index
    %5 = vector.load %arg2[%c0_6, %c0_7] : memref<80x21xf32, #tpu.memory_space<vmem>>, vector<80x21xf32>
    %cst = arith.constant dense<0.000000e+00> : vector<80x128xf32>
    %6 = tpu.matmul %5, %0, %cst {dimension_numbers = #tpu.dot_dimension_numbers<[1], [0], [0], [1], [0, 0, 1, 1], [], []>} : vector<80x21xf32>, vector<21x128xf32>, vector<80x128xf32> -> vector<80x128xf32>
    %7 = vector.broadcast %1 : vector<80x1xf32> to vector<80x128xf32>
    %8 = arith.addf %6, %7 : vector<80x128xf32>
    %cst_8 = arith.constant 0.00999999977 : f32
    %9 = vector.broadcast %cst_8 : f32 to vector<80x128xf32>
    %10 = arith.mulf %9, %8 : vector<80x128xf32>
    %11 = arith.maximumf %8, %10 : vector<80x128xf32>
    %c0_9 = arith.constant 0 : index
    %c0_10 = arith.constant 0 : index
    %12 = vector.load %arg3[%c0_9, %c0_10] : memref<80x21xf32, #tpu.memory_space<vmem>>, vector<80x21xf32>
    %cst_11 = arith.constant dense<0.000000e+00> : vector<80x128xf32>
    %13 = tpu.matmul %12, %0, %cst_11 {dimension_numbers = #tpu.dot_dimension_numbers<[1], [0], [0], [1], [0, 0, 1, 1], [], []>} : vector<80x21xf32>, vector<21x128xf32>, vector<80x128xf32> -> vector<80x128xf32>
    %14 = vector.broadcast %1 : vector<80x1xf32> to vector<80x128xf32>
    %15 = arith.addf %13, %14 : vector<80x128xf32>
    %cst_12 = arith.constant 0.00999999977 : f32
    %16 = vector.broadcast %cst_12 : f32 to vector<80x128xf32>
    %17 = arith.mulf %16, %15 : vector<80x128xf32>
    %18 = arith.maximumf %15, %17 : vector<80x128xf32>
    %c0_13 = arith.constant 0 : index
    %c0_14 = arith.constant 0 : index
    %19 = vector.load %arg4[%c0_13, %c0_14] : memref<80x80xf32, #tpu.memory_space<vmem>>, vector<80x80xf32>
    %cst_15 = arith.constant dense<0.000000e+00> : vector<80x128xf32>
    %20 = tpu.matmul %19, %11, %cst_15 {dimension_numbers = #tpu.dot_dimension_numbers<[1], [0], [0], [1], [0, 0, 1, 1], [], []>} : vector<80x80xf32>, vector<80x128xf32>, vector<80x128xf32> -> vector<80x128xf32>
    %21 = vector.broadcast %2 : vector<80x1xf32> to vector<80x128xf32>
    %22 = arith.addf %20, %21 : vector<80x128xf32>
    %cst_16 = arith.constant 0.00999999977 : f32
    %23 = vector.broadcast %cst_16 : f32 to vector<80x128xf32>
    %24 = arith.mulf %23, %22 : vector<80x128xf32>
    %25 = arith.maximumf %22, %24 : vector<80x128xf32>
    %c0_17 = arith.constant 0 : index
    %c0_18 = arith.constant 0 : index
    %26 = vector.load %arg4[%c0_17, %c0_18] : memref<80x80xf32, #tpu.memory_space<vmem>>, vector<80x80xf32>
    %cst_19 = arith.constant dense<0.000000e+00> : vector<80x128xf32>
    %27 = tpu.matmul %26, %18, %cst_19 {dimension_numbers = #tpu.dot_dimension_numbers<[1], [0], [0], [1], [0, 0, 1, 1], [], []>} : vector<80x80xf32>, vector<80x128xf32>, vector<80x128xf32> -> vector<80x128xf32>
    %28 = vector.broadcast %2 : vector<80x1xf32> to vector<80x128xf32>
    %29 = arith.addf %27, %28 : vector<80x128xf32>
    %cst_20 = arith.constant 0.00999999977 : f32
    %30 = vector.broadcast %cst_20 : f32 to vector<80x128xf32>
    %31 = arith.mulf %30, %29 : vector<80x128xf32>
    %32 = arith.maximumf %29, %31 : vector<80x128xf32>
    %c0_21 = arith.constant 0 : index
    %c0_22 = arith.constant 0 : index
    %33 = vector.load %arg5[%c0_21, %c0_22] : memref<40x80xf32, #tpu.memory_space<vmem>>, vector<40x80xf32>
    %cst_23 = arith.constant dense<0.000000e+00> : vector<40x128xf32>
    %34 = tpu.matmul %33, %25, %cst_23 {dimension_numbers = #tpu.dot_dimension_numbers<[1], [0], [0], [1], [0, 0, 1, 1], [], []>} : vector<40x80xf32>, vector<80x128xf32>, vector<40x128xf32> -> vector<40x128xf32>
    %35 = vector.broadcast %3 : vector<40x1xf32> to vector<40x128xf32>
    %36 = arith.addf %34, %35 : vector<40x128xf32>
    %cst_24 = arith.constant 0.00999999977 : f32
    %37 = vector.broadcast %cst_24 : f32 to vector<40x128xf32>
    %38 = arith.mulf %37, %36 : vector<40x128xf32>
    %39 = arith.maximumf %36, %38 : vector<40x128xf32>
    %c0_25 = arith.constant 0 : index
    %c0_26 = arith.constant 0 : index
    %40 = vector.load %arg5[%c0_25, %c0_26] : memref<40x80xf32, #tpu.memory_space<vmem>>, vector<40x80xf32>
    %cst_27 = arith.constant dense<0.000000e+00> : vector<40x128xf32>
    %41 = tpu.matmul %40, %32, %cst_27 {dimension_numbers = #tpu.dot_dimension_numbers<[1], [0], [0], [1], [0, 0, 1, 1], [], []>} : vector<40x80xf32>, vector<80x128xf32>, vector<40x128xf32> -> vector<40x128xf32>
    %42 = vector.broadcast %3 : vector<40x1xf32> to vector<40x128xf32>
    %43 = arith.addf %41, %42 : vector<40x128xf32>
    %cst_28 = arith.constant 0.00999999977 : f32
    %44 = vector.broadcast %cst_28 : f32 to vector<40x128xf32>
    %45 = arith.mulf %44, %43 : vector<40x128xf32>
    %46 = arith.maximumf %43, %45 : vector<40x128xf32>
    %c0_29 = arith.constant 0 : index
    %c0_30 = arith.constant 0 : index
    %47 = vector.load %arg6[%c0_29, %c0_30] : memref<20x40xf32, #tpu.memory_space<vmem>>, vector<20x40xf32>
    %cst_31 = arith.constant dense<0.000000e+00> : vector<20x128xf32>
    %48 = tpu.matmul %47, %39, %cst_31 {dimension_numbers = #tpu.dot_dimension_numbers<[1], [0], [0], [1], [0, 0, 1, 1], [], []>} : vector<20x40xf32>, vector<40x128xf32>, vector<20x128xf32> -> vector<20x128xf32>
    %49 = vector.broadcast %4 : vector<20x1xf32> to vector<20x128xf32>
    %50 = arith.addf %48, %49 : vector<20x128xf32>
    %cst_32 = arith.constant 0.00999999977 : f32
    %51 = vector.broadcast %cst_32 : f32 to vector<20x128xf32>
    %52 = arith.mulf %51, %50 : vector<20x128xf32>
    %53 = arith.maximumf %50, %52 : vector<20x128xf32>
    %c0_33 = arith.constant 0 : index
    %c0_34 = arith.constant 0 : index
    %54 = vector.load %arg6[%c0_33, %c0_34] : memref<20x40xf32, #tpu.memory_space<vmem>>, vector<20x40xf32>
    %cst_35 = arith.constant dense<0.000000e+00> : vector<20x128xf32>
    %55 = tpu.matmul %54, %46, %cst_35 {dimension_numbers = #tpu.dot_dimension_numbers<[1], [0], [0], [1], [0, 0, 1, 1], [], []>} : vector<20x40xf32>, vector<40x128xf32>, vector<20x128xf32> -> vector<20x128xf32>
    %56 = vector.broadcast %4 : vector<20x1xf32> to vector<20x128xf32>
    %57 = arith.addf %55, %56 : vector<20x128xf32>
    %cst_36 = arith.constant 0.00999999977 : f32
    %58 = vector.broadcast %cst_36 : f32 to vector<20x128xf32>
    %59 = arith.mulf %58, %57 : vector<20x128xf32>
    %60 = arith.maximumf %57, %59 : vector<20x128xf32>
    %61 = arith.subf %53, %60 : vector<20x128xf32>
    %c0_37 = arith.constant 0 : index
    %c0_38 = arith.constant 0 : index
    %62 = vector.load %arg7[%c0_37, %c0_38] : memref<1x20xf32, #tpu.memory_space<vmem>>, vector<1x20xf32>
    %cst_39 = arith.constant dense<0.000000e+00> : vector<1x128xf32>
    %63 = tpu.matmul %62, %61, %cst_39 {dimension_numbers = #tpu.dot_dimension_numbers<[1], [0], [0], [1], [0, 0, 1, 1], [], []>} : vector<1x20xf32>, vector<20x128xf32>, vector<1x128xf32> -> vector<1x128xf32>
    %c0_40 = arith.constant 0 : index
    %c0_41 = arith.constant 0 : index
    %64 = vector.load %arg9[%c0_40, %c0_41] : memref<1x128xf32, #tpu.memory_space<vmem>>, vector<1x128xf32>
    tpu.vector_store %arg9[%c0_40, %c0_41], %63 {strides = array<i32>} : memref<1x128xf32, #tpu.memory_space<vmem>>, vector<1x128xf32>,
    return
  }
  func.func @transform_0(%arg0: i32) -> (i32, i32) {
    %c0_i32 = arith.constant 0 : i32
    %c0_i32_0 = arith.constant 0 : i32
    return %c0_i32, %arg0 : i32, i32
  }
  func.func @transform_1(%arg0: i32) -> (i32, i32) {
    %c0_i32 = arith.constant 0 : i32
    %c0_i32_0 = arith.constant 0 : i32
    %c0_i32_1 = arith.constant 0 : i32
    return %c0_i32, %c0_i32_0 : i32, i32
  }
  func.func @transform_2(%arg0: i32) -> (i32, i32) {
    %c0_i32 = arith.constant 0 : i32
    %c0_i32_0 = arith.constant 0 : i32
    %c0_i32_1 = arith.constant 0 : i32
    return %c0_i32, %c0_i32_0 : i32, i32
  }
  func.func @transform_3(%arg0: i32) -> (i32, i32) {
    %c0_i32 = arith.constant 0 : i32
    %c0_i32_0 = arith.constant 0 : i32
    %c0_i32_1 = arith.constant 0 : i32
    return %c0_i32, %c0_i32_0 : i32, i32
  }
  func.func @transform_4(%arg0: i32) -> (i32, i32) {
    %c0_i32 = arith.constant 0 : i32
    %c0_i32_0 = arith.constant 0 : i32
    %c0_i32_1 = arith.constant 0 : i32
    return %c0_i32, %c0_i32_0 : i32, i32
  }
  func.func @transform_5(%arg0: i32) -> (i32, i32) {
    %c0_i32 = arith.constant 0 : i32
    %c0_i32_0 = arith.constant 0 : i32
    %c0_i32_1 = arith.constant 0 : i32
    return %c0_i32, %c0_i32_0 : i32, i32
  }
  func.func @transform_6(%arg0: i32) -> (i32, i32) {
    %c0_i32 = arith.constant 0 : i32
    %c0_i32_0 = arith.constant 0 : i32
    %c0_i32_1 = arith.constant 0 : i32
    return %c0_i32, %c0_i32_0 : i32, i32
  }
  func.func @transform_7(%arg0: i32) -> (i32, i32) {
    %c0_i32 = arith.constant 0 : i32
    %c0_i32_0 = arith.constant 0 : i32
    %c0_i32_1 = arith.constant 0 : i32
    return %c0_i32, %c0_i32_0 : i32, i32
  }
  func.func @transform_8(%arg0: i32) -> (i32, i32) {
    %c0_i32 = arith.constant 0 : i32
    %c0_i32_0 = arith.constant 0 : i32
    return %c0_i32, %arg0 : i32, i32
  }
}

</mosaic_0001>

<llo_original>
// kernel: network_forward.1
$region0: #{network_forward.1}
  #allocation0 [shape = 'u32[]', space=smem, size = 0x4, offset = 0x4, fixed_abs, tag = 'smem constant byte address 0x4 - core index']
  #allocation1 [shape = 'u32[144,128]{1,0:T(1,128)}', space=vmem, size = 0x12000, scoped, tag = 'internal scratch']
  %s0 = inlined_call_operand.vmem [shape: f32[21,128], index: 0, kind: input, shape index: {}]
  %s1 = inlined_call_operand.vmem [shape: f32[80,21], index: 1, kind: input, shape index: {}]
  %s2 = inlined_call_operand.vmem [shape: f32[80,21], index: 2, kind: input, shape index: {}]
  %s3 = inlined_call_operand.vmem [shape: f32[80,80], index: 3, kind: input, shape index: {}]
  %s4 = inlined_call_operand.vmem [shape: f32[40,80], index: 4, kind: input, shape index: {}]
  %s5 = inlined_call_operand.vmem [shape: f32[20,40], index: 5, kind: input, shape index: {}]
  %s6 = inlined_call_operand.vmem [shape: f32[1,20], index: 6, kind: input, shape index: {}]
  %s7 = inlined_call_operand.vmem [shape: f32[80,4], index: 7, kind: input, shape index: {}]
  %s8 = inlined_call_operand.vmem [shape: f32[1,128], index: 8, kind: output, shape index: {}]
  %s9 = sld [smem:[#allocation0]]
  $region42: #{network_forward.1} parent=0
    _
  %s11 = ssub.s32 1, %s9
  %s12 = scalar_select 0, %s11, %s9
  // Predicated region
  $region2: #{network_forward.1} parent=0 // pred_check
    _
  $region3: #{network_forward.1} parent=0 // pred_check_branch
    %14 = sbr.rel (0) target = $region5
  $region4: #{network_forward.1} parent=0 // pred_region
    _
  $region5: #{network_forward.1} parent=0 // pred_fallthru
    _
  // Predicated region
  $region6: #{network_forward.1} parent=0 // pred_check
    _
  $region7: #{network_forward.1} parent=0 // pred_check_branch
    %16 = sbr.rel (0) target = $region9
  $region8: #{network_forward.1} parent=0 // pred_region
    _
  $region9: #{network_forward.1} parent=0 // pred_fallthru
    _
  // Predicated region
  $region10: #{network_forward.1} parent=0 // pred_check
    _
  $region11: #{network_forward.1} parent=0 // pred_check_branch
    %18 = sbr.rel (0) target = $region13
  $region12: #{network_forward.1} parent=0 // pred_region
    _
  $region13: #{network_forward.1} parent=0 // pred_fallthru
    _
  // Predicated region
  $region14: #{network_forward.1} parent=0 // pred_check
    _
  $region15: #{network_forward.1} parent=0 // pred_check_branch
    %20 = sbr.rel (0) target = $region17
  $region16: #{network_forward.1} parent=0 // pred_region
    _
  $region17: #{network_forward.1} parent=0 // pred_fallthru
    _
  // Predicated region
  $region18: #{network_forward.1} parent=0 // pred_check
    _
  $region19: #{network_forward.1} parent=0 // pred_check_branch
    %22 = sbr.rel (0) target = $region21
  $region20: #{network_forward.1} parent=0 // pred_region
    _
  $region21: #{network_forward.1} parent=0 // pred_fallthru
    _
  // Predicated region
  $region22: #{network_forward.1} parent=0 // pred_check
    _
  $region23: #{network_forward.1} parent=0 // pred_check_branch
    %24 = sbr.rel (0) target = $region25
  $region24: #{network_forward.1} parent=0 // pred_region
    _
  $region25: #{network_forward.1} parent=0 // pred_fallthru
    _
  // Predicated region
  $region26: #{network_forward.1} parent=0 // pred_check
    _
  $region27: #{network_forward.1} parent=0 // pred_check_branch
    %26 = sbr.rel (0) target = $region29
  $region28: #{network_forward.1} parent=0 // pred_region
    _
  $region29: #{network_forward.1} parent=0 // pred_fallthru
    _
  // Predicated region
  $region30: #{network_forward.1} parent=0 // pred_check
    _
  $region31: #{network_forward.1} parent=0 // pred_check_branch
    %28 = sbr.rel (0) target = $region33
  $region32: #{network_forward.1} parent=0 // pred_region
    _
  $region33: #{network_forward.1} parent=0 // pred_fallthru
    _
  %v29 = vld [vmem:[%s0] sm:$0xff]
  %v30 = vld [vmem:[%s0 + $0x8] sm:$0xff]
  %v31 = vld [vmem:[%s0 + $0x10] sm:$0x1f]
  %v32 = vld [vmem:[%s7] sm:$0xff]
  %v33 = vld [vmem:[%s7 + $0x8] sm:$0xff]
  %v34 = vld [vmem:[%s7 + $0x10] sm:$0xff]
  %v35 = vld [vmem:[%s7 + $0x18] sm:$0xff]
  %v36 = vld [vmem:[%s7 + $0x20] sm:$0xff]
  %v37 = vld [vmem:[%s7 + $0x28] sm:$0xff]
  %v38 = vld [vmem:[%s7 + $0x30] sm:$0xff]
  %v39 = vld [vmem:[%s7 + $0x38] sm:$0xff]
  %v40 = vld [vmem:[%s7 + $0x40] sm:$0xff]
  %v41 = vld [vmem:[%s7 + $0x48] sm:$0xff]
  %v42 = vld [vmem:[%s7 + $0x10] sm:$0xf]
  %v43 = vld [vmem:[%s1] sm:$0xff]
  %v44 = vld [vmem:[%s1 + $0x8] sm:$0xff]
  %v45 = vld [vmem:[%s1 + $0x10] sm:$0xff]
  %v46 = vld [vmem:[%s1 + $0x18] sm:$0xff]
  %v47 = vld [vmem:[%s1 + $0x20] sm:$0xff]
  %v48 = vld [vmem:[%s1 + $0x28] sm:$0xff]
  %v49 = vld [vmem:[%s1 + $0x30] sm:$0xff]
  %v50 = vld [vmem:[%s1 + $0x38] sm:$0xff]
  %v51 = vld [vmem:[%s1 + $0x40] sm:$0xff]
  %v52 = vld [vmem:[%s1 + $0x48] sm:$0xff]
  %54 = vset.pattern.permute.xlu0 0
  %55 = vperm.xlu0 %54, %v32
  %v56 = vpop.permute.xlu0 %55
  %59 = vset.pattern.permute.xlu0 0
  %60 = vperm.xlu0 %59, %v33
  %v61 = vpop.permute.xlu0 %60
  %64 = vset.pattern.permute.xlu0 0
  %65 = vperm.xlu0 %64, %v34
  %v66 = vpop.permute.xlu0 %65
  %69 = vset.pattern.permute.xlu0 0
  %70 = vperm.xlu0 %69, %v35
  %v71 = vpop.permute.xlu0 %70
  %74 = vset.pattern.permute.xlu0 0
  %75 = vperm.xlu0 %74, %v36
  %v76 = vpop.permute.xlu0 %75
  %79 = vset.pattern.permute.xlu0 0
  %80 = vperm.xlu0 %79, %v37
  %v81 = vpop.permute.xlu0 %80
  %84 = vset.pattern.permute.xlu0 0
  %85 = vperm.xlu0 %84, %v38
  %v86 = vpop.permute.xlu0 %85
  %89 = vset.pattern.permute.xlu0 0
  %90 = vperm.xlu0 %89, %v39
  %v91 = vpop.permute.xlu0 %90
  %94 = vset.pattern.permute.xlu0 0
  %95 = vperm.xlu0 %94, %v40
  %v96 = vpop.permute.xlu0 %95
  %99 = vset.pattern.permute.xlu0 0
  %100 = vperm.xlu0 %99, %v41
  %v101 = vpop.permute.xlu0 %100
  %vm103 = vcmask 171008
  %v105 = vsel %vm103, %v43, 0
  %v108 = vsel %vm103, %v44, 0
  %v111 = vsel %vm103, %v45, 0
  %v114 = vsel %vm103, %v46, 0
  %v117 = vsel %vm103, %v47, 0
  %v120 = vsel %vm103, %v48, 0
  %v123 = vsel %vm103, %v49, 0
  %v126 = vsel %vm103, %v50, 0
  %v129 = vsel %vm103, %v51, 0
  %v132 = vsel %vm103, %v52, 0
  %vm134 = vcmask 1044480
  %v136 = vsel %vm134, %v31, 0
  %138 = vmatprep.subr.mxu0 0.0
  %139 = vmatpush1.msra.mxu0 %v29
  %140 = vmatprep.subr.mxu0 0.0
  %141 = vmatpush1.msra.mxu0 %v30
  %142 = vmatprep.subr.mxu0 0.0
  %143 = vmatpush1.msra.mxu0 %v136
  %144 = vmatprep.subr.mxu0 0.0
  %145 = vmatpush1.msra.mxu0 0.0
  %146 = vmatprep.subr.mxu0 0.0
  %147 = vmatpush1.msra.mxu0 0.0
  %148 = vmatprep.subr.mxu0 0.0
  %149 = vmatpush1.msra.mxu0 0.0
  %150 = vmatprep.subr.mxu0 0.0
  %151 = vmatpush1.msra.mxu0 0.0
  %152 = vmatprep.subr.mxu0 0.0
  %153 = vmatpush1.msra.mxu0 0.0
  %154 = vmatprep.subr.mxu0 0.0
  %155 = vmatpush1.msra.mxu0 0.0
  %156 = vmatprep.subr.mxu0 0.0
  %157 = vmatpush1.msra.mxu0 0.0
  %158 = vmatprep.subr.mxu0 0.0
  %159 = vmatpush1.msra.mxu0 0.0
  %160 = vmatprep.subr.mxu0 0.0
  %161 = vmatpush1.msra.mxu0 0.0
  %162 = vmatprep.subr.mxu0 0.0
  %163 = vmatpush1.msra.mxu0 0.0
  %164 = vmatprep.subr.mxu0 0.0
  %165 = vmatpush1.msra.mxu0 0.0
  %166 = vmatprep.subr.mxu0 0.0
  %167 = vmatpush1.msra.mxu0 0.0
  %168 = vmatprep.subr.mxu0 0.0
  %169 = vmatpush1.msra.mxu0 0.0
  %170 = vmatprep.subr.mxu0 0.0
  %171 = vmatpush1.msra.mxu0 0.0
  %172 = vmatprep.subr.mxu0 0.0
  %173 = vmatpush1.msra.mxu0 0.0
  %174 = vmatprep.subr.mxu0 0.0
  %175 = vmatpush1.msra.mxu0 0.0
  %176 = vmatprep.subr.mxu0 0.0
  %177 = vmatpush1.msra.mxu0 0.0
  %178 = vmatprep.subr.mxu0 0.0
  %179 = vmatpush1.msra.mxu0 0.0
  %180 = vmatprep.subr.mxu0 0.0
  %181 = vmatpush1.msra.mxu0 0.0
  %182 = vmatprep.subr.mxu0 0.0
  %183 = vmatpush1.msra.mxu0 0.0
  %184 = vmatprep.subr.mxu0 0.0
  %185 = vmatpush1.msra.mxu0 0.0
  %186 = vmatprep.subr.mxu0 0.0
  %187 = vmatpush1.msra.mxu0 0.0
  %188 = vmatprep.subr.mxu0 0.0
  %189 = vmatpush1.msra.mxu0 0.0
  %190 = vmatprep.subr.mxu0 0.0
  %191 = vmatpush1.msra.mxu0 0.0
  %192 = vmatprep.subr.mxu0 0.0
  %193 = vmatpush1.msra.mxu0 0.0
  %194 = vmatprep.subr.mxu0 0.0
  %195 = vmatpush1.msra.mxu0 0.0
  %196 = vmatprep.subr.mxu0 0.0
  %197 = vmatpush1.msra.mxu0 0.0
  %198 = vmatprep.subr.mxu0 0.0
  %199 = vmatpush1.msra.mxu0 0.0
  %200 = vmatprep.subr.mxu0 0.0
  %201 = vmatpush1.msra.mxu0 0.0
  %202 = vmatprep.mubr.f32.mxu0 0.0
  %203 = vmatmul.mubr.f32.gmra.mrb[0].mxu0 %v105
  %v204 = vpop.f32.mrb[0].mxu0
  %v205 = vadd.f32 %v56, %v204
  %v206 = vpop.f32.mrb[0].mxu0
  %207 = vmatprep.mubr.f32.mxu0 0.0
  %208 = vmatmul.mubr.f32.gmra.mrb[0].mxu0 %v108
  %v209 = vpop.f32.mrb[0].mxu0
  %v210 = vadd.f32 %v61, %v209
  %v211 = vpop.f32.mrb[0].mxu0
  %212 = vmatprep.mubr.f32.mxu0 0.0
  %213 = vmatmul.mubr.f32.gmra.mrb[0].mxu0 %v111
  %v214 = vpop.f32.mrb[0].mxu0
  %v215 = vadd.f32 %v66, %v214
  %v216 = vpop.f32.mrb[0].mxu0
  %217 = vmatprep.mubr.f32.mxu0 0.0
  %218 = vmatmul.mubr.f32.gmra.mrb[0].mxu0 %v114
  %v219 = vpop.f32.mrb[0].mxu0
  %v220 = vadd.f32 %v71, %v219
  %v221 = vpop.f32.mrb[0].mxu0
  %222 = vmatprep.mubr.f32.mxu0 0.0
  %223 = vmatmul.mubr.f32.gmra.mrb[0].mxu0 %v117
  %v224 = vpop.f32.mrb[0].mxu0
  %v225 = vadd.f32 %v76, %v224
  %v226 = vpop.f32.mrb[0].mxu0
  %227 = vmatprep.mubr.f32.mxu0 0.0
  %228 = vmatmul.mubr.f32.gmra.mrb[0].mxu0 %v120
  %v229 = vpop.f32.mrb[0].mxu0
  %v230 = vadd.f32 %v81, %v229
  %v231 = vpop.f32.mrb[0].mxu0
  %232 = vmatprep.mubr.f32.mxu0 0.0
  %233 = vmatmul.mubr.f32.gmra.mrb[0].mxu0 %v123
  %v234 = vpop.f32.mrb[0].mxu0
  %v235 = vadd.f32 %v86, %v234
  %v236 = vpop.f32.mrb[0].mxu0
  %237 = vmatprep.mubr.f32.mxu0 0.0
  %238 = vmatmul.mubr.f32.gmra.mrb[0].mxu0 %v126
  %v239 = vpop.f32.mrb[0].mxu0
  %v240 = vadd.f32 %v91, %v239
  %v241 = vpop.f32.mrb[0].mxu0
  %242 = vmatprep.mubr.f32.mxu0 0.0
  %243 = vmatmul.mubr.f32.gmra.mrb[0].mxu0 %v129
  %v244 = vpop.f32.mrb[0].mxu0
  %v245 = vadd.f32 %v96, %v244
  %v246 = vpop.f32.mrb[0].mxu0
  %247 = vmatprep.mubr.f32.mxu0 0.0
  %248 = vmatmul.mubr.f32.gmra.mrb[0].mxu0 %v132
  %v249 = vpop.f32.mrb[0].mxu0
  %v250 = vadd.f32 %v101, %v249
  %v251 = vpop.f32.mrb[0].mxu0
  %252 = vdwg.mxu0
  %v253 = vmul.f32 %v205, 0.01
  %v254 = vmul.f32 %v210, 0.01
  %v255 = vmul.f32 %v215, 0.01
  %v256 = vmul.f32 %v220, 0.01
  %v257 = vmul.f32 %v225, 0.01
  %v258 = vmul.f32 %v230, 0.01
  %v259 = vmul.f32 %v235, 0.01
  %v260 = vmul.f32 %v240, 0.01
  %v261 = vmul.f32 %v245, 0.01
  %v262 = vmul.f32 %v250, 0.01
  %v263 = vmax.f32 %v205, %v253
  %v264 = vmax.f32 %v210, %v254
  %v265 = vmax.f32 %v215, %v255
  %v266 = vmax.f32 %v220, %v256
  %v267 = vmax.f32 %v225, %v257
  %v268 = vmax.f32 %v230, %v258
  %v269 = vmax.f32 %v235, %v259
  %v270 = vmax.f32 %v240, %v260
  %v271 = vmax.f32 %v245, %v261
  %v272 = vmax.f32 %v250, %v262
  %v273 = vld [vmem:[%s2] sm:$0xff]
  %v274 = vld [vmem:[%s2 + $0x8] sm:$0xff]
  %v275 = vld [vmem:[%s2 + $0x10] sm:$0xff]
  %v276 = vld [vmem:[%s2 + $0x18] sm:$0xff]
  %v277 = vld [vmem:[%s2 + $0x20] sm:$0xff]
  %v278 = vld [vmem:[%s2 + $0x28] sm:$0xff]
  %v279 = vld [vmem:[%s2 + $0x30] sm:$0xff]
  %v280 = vld [vmem:[%s2 + $0x38] sm:$0xff]
  %v281 = vld [vmem:[%s2 + $0x40] sm:$0xff]
  %v282 = vld [vmem:[%s2 + $0x48] sm:$0xff]
  %v284 = vsel %vm103, %v273, 0
  %v287 = vsel %vm103, %v274, 0
  %v290 = vsel %vm103, %v275, 0
  %v293 = vsel %vm103, %v276, 0
  %v296 = vsel %vm103, %v277, 0
  %v299 = vsel %vm103, %v278, 0
  %v302 = vsel %vm103, %v279, 0
  %v305 = vsel %vm103, %v280, 0
  %v308 = vsel %vm103, %v281, 0
  %v311 = vsel %vm103, %v282, 0
  %313 = vmatprep.subr.mxu0 0.0
  %314 = vmatpush1.msra.mxu0 %v29
  %315 = vmatprep.subr.mxu0 0.0
  %316 = vmatpush1.msra.mxu0 %v30
  %317 = vmatprep.subr.mxu0 0.0
  %318 = vmatpush1.msra.mxu0 %v136
  %319 = vmatprep.subr.mxu0 0.0
  %320 = vmatpush1.msra.mxu0 0.0
  %321 = vmatprep.subr.mxu0 0.0
  %322 = vmatpush1.msra.mxu0 0.0
  %323 = vmatprep.subr.mxu0 0.0
  %324 = vmatpush1.msra.mxu0 0.0
  %325 = vmatprep.subr.mxu0 0.0
  %326 = vmatpush1.msra.mxu0 0.0
  %327 = vmatprep.subr.mxu0 0.0
  %328 = vmatpush1.msra.mxu0 0.0
  %329 = vmatprep.subr.mxu0 0.0
  %330 = vmatpush1.msra.mxu0 0.0
  %331 = vmatprep.subr.mxu0 0.0
  %332 = vmatpush1.msra.mxu0 0.0
  %333 = vmatprep.subr.mxu0 0.0
  %334 = vmatpush1.msra.mxu0 0.0
  %335 = vmatprep.subr.mxu0 0.0
  %336 = vmatpush1.msra.mxu0 0.0
  %337 = vmatprep.subr.mxu0 0.0
  %338 = vmatpush1.msra.mxu0 0.0
  %339 = vmatprep.subr.mxu0 0.0
  %340 = vmatpush1.msra.mxu0 0.0
  %341 = vmatprep.subr.mxu0 0.0
  %342 = vmatpush1.msra.mxu0 0.0
  %343 = vmatprep.subr.mxu0 0.0
  %344 = vmatpush1.msra.mxu0 0.0
  %345 = vmatprep.subr.mxu0 0.0
  %346 = vmatpush1.msra.mxu0 0.0
  %347 = vmatprep.subr.mxu0 0.0
  %348 = vmatpush1.msra.mxu0 0.0
  %349 = vmatprep.subr.mxu0 0.0
  %350 = vmatpush1.msra.mxu0 0.0
  %351 = vmatprep.subr.mxu0 0.0
  %352 = vmatpush1.msra.mxu0 0.0
  %353 = vmatprep.subr.mxu0 0.0
  %354 = vmatpush1.msra.mxu0 0.0
  %355 = vmatprep.subr.mxu0 0.0
  %356 = vmatpush1.msra.mxu0 0.0
  %357 = vmatprep.subr.mxu0 0.0
  %358 = vmatpush1.msra.mxu0 0.0
  %359 = vmatprep.subr.mxu0 0.0
  %360 = vmatpush1.msra.mxu0 0.0
  %361 = vmatprep.subr.mxu0 0.0
  %362 = vmatpush1.msra.mxu0 0.0
  %363 = vmatprep.subr.mxu0 0.0
  %364 = vmatpush1.msra.mxu0 0.0
  %365 = vmatprep.subr.mxu0 0.0
  %366 = vmatpush1.msra.mxu0 0.0
  %367 = vmatprep.subr.mxu0 0.0
  %368 = vmatpush1.msra.mxu0 0.0
  %369 = vmatprep.subr.mxu0 0.0
  %370 = vmatpush1.msra.mxu0 0.0
  %371 = vmatprep.subr.mxu0 0.0
  %372 = vmatpush1.msra.mxu0 0.0
  %373 = vmatprep.subr.mxu0 0.0
  %374 = vmatpush1.msra.mxu0 0.0
  %375 = vmatprep.subr.mxu0 0.0
  %376 = vmatpush1.msra.mxu0 0.0
  %377 = vmatprep.mubr.f32.mxu0 0.0
  %378 = vmatmul.mubr.f32.gmra.mrb[0].mxu0 %v284
  %v379 = vpop.f32.mrb[0].mxu0
  %v380 = vadd.f32 %v56, %v379
  %v381 = vpop.f32.mrb[0].mxu0
  %382 = vmatprep.mubr.f32.mxu0 0.0
  %383 = vmatmul.mubr.f32.gmra.mrb[0].mxu0 %v287
  %v384 = vpop.f32.mrb[0].mxu0
  %v385 = vadd.f32 %v61, %v384
  %v386 = vpop.f32.mrb[0].mxu0
  %387 = vmatprep.mubr.f32.mxu0 0.0
  %388 = vmatmul.mubr.f32.gmra.mrb[0].mxu0 %v290
  %v389 = vpop.f32.mrb[0].mxu0
  %v390 = vadd.f32 %v66, %v389
  %v391 = vpop.f32.mrb[0].mxu0
  %392 = vmatprep.mubr.f32.mxu0 0.0
  %393 = vmatmul.mubr.f32.gmra.mrb[0].mxu0 %v293
  %v394 = vpop.f32.mrb[0].mxu0
  %v395 = vadd.f32 %v71, %v394
  %v396 = vpop.f32.mrb[0].mxu0
  %397 = vmatprep.mubr.f32.mxu0 0.0
  %398 = vmatmul.mubr.f32.gmra.mrb[0].mxu0 %v296
  %v399 = vpop.f32.mrb[0].mxu0
  %v400 = vadd.f32 %v76, %v399
  %v401 = vpop.f32.mrb[0].mxu0
  %402 = vmatprep.mubr.f32.mxu0 0.0
  %403 = vmatmul.mubr.f32.gmra.mrb[0].mxu0 %v299
  %v404 = vpop.f32.mrb[0].mxu0
  %v405 = vadd.f32 %v81, %v404
  %v406 = vpop.f32.mrb[0].mxu0
  %407 = vmatprep.mubr.f32.mxu0 0.0
  %408 = vmatmul.mubr.f32.gmra.mrb[0].mxu0 %v302
  %v409 = vpop.f32.mrb[0].mxu0
  %v410 = vadd.f32 %v86, %v409
  %v411 = vpop.f32.mrb[0].mxu0
  %412 = vmatprep.mubr.f32.mxu0 0.0
  %413 = vmatmul.mubr.f32.gmra.mrb[0].mxu0 %v305
  %v414 = vpop.f32.mrb[0].mxu0
  %v415 = vadd.f32 %v91, %v414
  %v416 = vpop.f32.mrb[0].mxu0
  %417 = vmatprep.mubr.f32.mxu0 0.0
  %418 = vmatmul.mubr.f32.gmra.mrb[0].mxu0 %v308
  %v419 = vpop.f32.mrb[0].mxu0
  %v420 = vadd.f32 %v96, %v419
  %v421 = vpop.f32.mrb[0].mxu0
  %422 = vmatprep.mubr.f32.mxu0 0.0
  %423 = vmatmul.mubr.f32.gmra.mrb[0].mxu0 %v311
  %v424 = vpop.f32.mrb[0].mxu0
  %v425 = vadd.f32 %v101, %v424
  %v426 = vpop.f32.mrb[0].mxu0
  %427 = vdwg.mxu0
  %v428 = vmul.f32 %v380, 0.01
  %v429 = vmul.f32 %v385, 0.01
  %v430 = vmul.f32 %v390, 0.01
  %v431 = vmul.f32 %v395, 0.01
  %v432 = vmul.f32 %v400, 0.01
  %v433 = vmul.f32 %v405, 0.01
  %v434 = vmul.f32 %v410, 0.01
  %v435 = vmul.f32 %v415, 0.01
  %v436 = vmul.f32 %v420, 0.01
  %v437 = vmul.f32 %v425, 0.01
  %v438 = vmax.f32 %v380, %v428
  %v439 = vmax.f32 %v385, %v429
  %v440 = vmax.f32 %v390, %v430
  %v441 = vmax.f32 %v395, %v431
  %v442 = vmax.f32 %v400, %v432
  %v443 = vmax.f32 %v405, %v433
  %v444 = vmax.f32 %v410, %v434
  %v445 = vmax.f32 %v415, %v435
  %v446 = vmax.f32 %v420, %v436
  %v447 = vmax.f32 %v425, %v437
  %v448 = vld [vmem:[%s3] sm:$0xff]
  %v449 = vld [vmem:[%s3 + $0x8] sm:$0xff]
  %v450 = vld [vmem:[%s3 + $0x10] sm:$0xff]
  %v451 = vld [vmem:[%s3 + $0x18] sm:$0xff]
  %v452 = vld [vmem:[%s3 + $0x20] sm:$0xff]
  %v453 = vld [vmem:[%s3 + $0x28] sm:$0xff]
  %v454 = vld [vmem:[%s3 + $0x30] sm:$0xff]
  %v455 = vld [vmem:[%s3 + $0x38] sm:$0xff]
  %v456 = vld [vmem:[%s3 + $0x40] sm:$0xff]
  %v457 = vld [vmem:[%s3 + $0x48] sm:$0xff]
  %458 = vset.pattern.permute.xlu0 1
  %459 = vperm.xlu0 %458, %v32
  %v460 = vpop.permute.xlu0 %459
  %462 = vset.pattern.permute.xlu0 1
  %463 = vperm.xlu0 %462, %v33
  %v464 = vpop.permute.xlu0 %463
  %466 = vset.pattern.permute.xlu0 1
  %467 = vperm.xlu0 %466, %v34
  %v468 = vpop.permute.xlu0 %467
  %470 = vset.pattern.permute.xlu0 1
  %471 = vperm.xlu0 %470, %v35
  %v472 = vpop.permute.xlu0 %471
  %474 = vset.pattern.permute.xlu0 1
  %475 = vperm.xlu0 %474, %v36
  %v476 = vpop.permute.xlu0 %475
  %478 = vset.pattern.permute.xlu0 1
  %479 = vperm.xlu0 %478, %v37
  %v480 = vpop.permute.xlu0 %479
  %482 = vset.pattern.permute.xlu0 1
  %483 = vperm.xlu0 %482, %v38
  %v484 = vpop.permute.xlu0 %483
  %486 = vset.pattern.permute.xlu0 1
  %487 = vperm.xlu0 %486, %v39
  %v488 = vpop.permute.xlu0 %487
  %490 = vset.pattern.permute.xlu0 1
  %491 = vperm.xlu0 %490, %v40
  %v492 = vpop.permute.xlu0 %491
  %494 = vset.pattern.permute.xlu0 1
  %495 = vperm.xlu0 %494, %v41
  %v496 = vpop.permute.xlu0 %495
  %vm498 = vcmask 654336
  %v500 = vsel %vm498, %v448, 0
  %v503 = vsel %vm498, %v449, 0
  %v506 = vsel %vm498, %v450, 0
  %v509 = vsel %vm498, %v451, 0
  %v512 = vsel %vm498, %v452, 0
  %v515 = vsel %vm498, %v453, 0
  %v518 = vsel %vm498, %v454, 0
  %v521 = vsel %vm498, %v455, 0
  %v524 = vsel %vm498, %v456, 0
  %v527 = vsel %vm498, %v457, 0
  %529 = vmatprep.subr.mxu0 0.0
  %530 = vmatpush1.msra.mxu0 %v263
  %531 = vmatprep.subr.mxu0 0.0
  %532 = vmatpush1.msra.mxu0 %v264
  %533 = vmatprep.subr.mxu0 0.0
  %534 = vmatpush1.msra.mxu0 %v265
  %535 = vmatprep.subr.mxu0 0.0
  %536 = vmatpush1.msra.mxu0 %v266
  %537 = vmatprep.subr.mxu0 0.0
  %538 = vmatpush1.msra.mxu0 %v267
  %539 = vmatprep.subr.mxu0 0.0
  %540 = vmatpush1.msra.mxu0 %v268
  %541 = vmatprep.subr.mxu0 0.0
  %542 = vmatpush1.msra.mxu0 %v269
  %543 = vmatprep.subr.mxu0 0.0
  %544 = vmatpush1.msra.mxu0 %v270
  %545 = vmatprep.subr.mxu0 0.0
  %546 = vmatpush1.msra.mxu0 %v271
  %547 = vmatprep.subr.mxu0 0.0
  %548 = vmatpush1.msra.mxu0 %v272
  %549 = vmatprep.subr.mxu0 0.0
  %550 = vmatpush1.msra.mxu0 0.0
  %551 = vmatprep.subr.mxu0 0.0
  %552 = vmatpush1.msra.mxu0 0.0
  %553 = vmatprep.subr.mxu0 0.0
  %554 = vmatpush1.msra.mxu0 0.0
  %555 = vmatprep.subr.mxu0 0.0
  %556 = vmatpush1.msra.mxu0 0.0
  %557 = vmatprep.subr.mxu0 0.0
  %558 = vmatpush1.msra.mxu0 0.0
  %559 = vmatprep.subr.mxu0 0.0
  %560 = vmatpush1.msra.mxu0 0.0
  %561 = vmatprep.subr.mxu0 0.0
  %562 = vmatpush1.msra.mxu0 0.0
  %563 = vmatprep.subr.mxu0 0.0
  %564 = vmatpush1.msra.mxu0 0.0
  %565 = vmatprep.subr.mxu0 0.0
  %566 = vmatpush1.msra.mxu0 0.0
  %567 = vmatprep.subr.mxu0 0.0
  %568 = vmatpush1.msra.mxu0 0.0
  %569 = vmatprep.subr.mxu0 0.0
  %570 = vmatpush1.msra.mxu0 0.0
  %571 = vmatprep.subr.mxu0 0.0
  %572 = vmatpush1.msra.mxu0 0.0
  %573 = vmatprep.subr.mxu0 0.0
  %574 = vmatpush1.msra.mxu0 0.0
  %575 = vmatprep.subr.mxu0 0.0
  %576 = vmatpush1.msra.mxu0 0.0
  %577 = vmatprep.subr.mxu0 0.0
  %578 = vmatpush1.msra.mxu0 0.0
  %579 = vmatprep.subr.mxu0 0.0
  %580 = vmatpush1.msra.mxu0 0.0
  %581 = vmatprep.subr.mxu0 0.0
  %582 = vmatpush1.msra.mxu0 0.0
  %583 = vmatprep.subr.mxu0 0.0
  %584 = vmatpush1.msra.mxu0 0.0
  %585 = vmatprep.subr.mxu0 0.0
  %586 = vmatpush1.msra.mxu0 0.0
  %587 = vmatprep.subr.mxu0 0.0
  %588 = vmatpush1.msra.mxu0 0.0
  %589 = vmatprep.subr.mxu0 0.0
  %590 = vmatpush1.msra.mxu0 0.0
  %591 = vmatprep.subr.mxu0 0.0
  %592 = vmatpush1.msra.mxu0 0.0
  %593 = vmatprep.mubr.f32.mxu0 0.0
  %594 = vmatmul.mubr.f32.gmra.mrb[0].mxu0 %v500
  %v595 = vpop.f32.mrb[0].mxu0
  %v596 = vadd.f32 %v460, %v595
  %v597 = vpop.f32.mrb[0].mxu0
  %598 = vmatprep.mubr.f32.mxu0 0.0
  %599 = vmatmul.mubr.f32.gmra.mrb[0].mxu0 %v503
  %v600 = vpop.f32.mrb[0].mxu0
  %v601 = vadd.f32 %v464, %v600
  %v602 = vpop.f32.mrb[0].mxu0
  %603 = vmatprep.mubr.f32.mxu0 0.0
  %604 = vmatmul.mubr.f32.gmra.mrb[0].mxu0 %v506
  %v605 = vpop.f32.mrb[0].mxu0
  %v606 = vadd.f32 %v468, %v605
  %v607 = vpop.f32.mrb[0].mxu0
  %608 = vmatprep.mubr.f32.mxu0 0.0
  %609 = vmatmul.mubr.f32.gmra.mrb[0].mxu0 %v509
  %v610 = vpop.f32.mrb[0].mxu0
  %v611 = vadd.f32 %v472, %v610
  %v612 = vpop.f32.mrb[0].mxu0
  %613 = vmatprep.mubr.f32.mxu0 0.0
  %614 = vmatmul.mubr.f32.gmra.mrb[0].mxu0 %v512
  %v615 = vpop.f32.mrb[0].mxu0
  %v616 = vadd.f32 %v476, %v615
  %v617 = vpop.f32.mrb[0].mxu0
  %618 = vmatprep.mubr.f32.mxu0 0.0
  %619 = vmatmul.mubr.f32.gmra.mrb[0].mxu0 %v515
  %v620 = vpop.f32.mrb[0].mxu0
  %v621 = vadd.f32 %v480, %v620
  %v622 = vpop.f32.mrb[0].mxu0
  %623 = vmatprep.mubr.f32.mxu0 0.0
  %624 = vmatmul.mubr.f32.gmra.mrb[0].mxu0 %v518
  %v625 = vpop.f32.mrb[0].mxu0
  %v626 = vadd.f32 %v484, %v625
  %v627 = vpop.f32.mrb[0].mxu0
  %628 = vmatprep.mubr.f32.mxu0 0.0
  %629 = vmatmul.mubr.f32.gmra.mrb[0].mxu0 %v521
  %v630 = vpop.f32.mrb[0].mxu0
  %v631 = vadd.f32 %v488, %v630
  %v632 = vpop.f32.mrb[0].mxu0
  %633 = vmatprep.mubr.f32.mxu0 0.0
  %634 = vmatmul.mubr.f32.gmra.mrb[0].mxu0 %v524
  %v635 = vpop.f32.mrb[0].mxu0
  %v636 = vadd.f32 %v492, %v635
  %v637 = vpop.f32.mrb[0].mxu0
  %638 = vmatprep.mubr.f32.mxu0 0.0
  %639 = vmatmul.mubr.f32.gmra.mrb[0].mxu0 %v527
  %v640 = vpop.f32.mrb[0].mxu0
  %v641 = vadd.f32 %v496, %v640
  %v642 = vpop.f32.mrb[0].mxu0
  %643 = vdwg.mxu0
  %v644 = vmul.f32 %v596, 0.01
  %v645 = vmul.f32 %v601, 0.01
  %v646 = vmul.f32 %v606, 0.01
  %v647 = vmul.f32 %v611, 0.01
  %v648 = vmul.f32 %v616, 0.01
  %v649 = vmul.f32 %v621, 0.01
  %v650 = vmul.f32 %v626, 0.01
  %v651 = vmul.f32 %v631, 0.01
  %v652 = vmul.f32 %v636, 0.01
  %v653 = vmul.f32 %v641, 0.01
  %v654 = vmax.f32 %v596, %v644
  %v655 = vmax.f32 %v601, %v645
  %v656 = vmax.f32 %v606, %v646
  %v657 = vmax.f32 %v611, %v647
  %v658 = vmax.f32 %v616, %v648
  %v659 = vmax.f32 %v621, %v649
  %v660 = vmax.f32 %v626, %v650
  %v661 = vmax.f32 %v631, %v651
  %v662 = vmax.f32 %v636, %v652
  %v663 = vmax.f32 %v641, %v653
  %664 = vmatprep.subr.mxu0 0.0
  %665 = vmatpush1.msra.mxu0 %v438
  %666 = vmatprep.subr.mxu0 0.0
  %667 = vmatpush1.msra.mxu0 %v439
  %668 = vmatprep.subr.mxu0 0.0
  %669 = vmatpush1.msra.mxu0 %v440
  %670 = vmatprep.subr.mxu0 0.0
  %671 = vmatpush1.msra.mxu0 %v441
  %672 = vmatprep.subr.mxu0 0.0
  %673 = vmatpush1.msra.mxu0 %v442
  %674 = vmatprep.subr.mxu0 0.0
  %675 = vmatpush1.msra.mxu0 %v443
  %676 = vmatprep.subr.mxu0 0.0
  %677 = vmatpush1.msra.mxu0 %v444
  %678 = vmatprep.subr.mxu0 0.0
  %679 = vmatpush1.msra.mxu0 %v445
  %680 = vmatprep.subr.mxu0 0.0
  %681 = vmatpush1.msra.mxu0 %v446
  %682 = vmatprep.subr.mxu0 0.0
  %683 = vmatpush1.msra.mxu0 %v447
  %684 = vmatprep.subr.mxu0 0.0
  %685 = vmatpush1.msra.mxu0 0.0
  %686 = vmatprep.subr.mxu0 0.0
  %687 = vmatpush1.msra.mxu0 0.0
  %688 = vmatprep.subr.mxu0 0.0
  %689 = vmatpush1.msra.mxu0 0.0
  %690 = vmatprep.subr.mxu0 0.0
  %691 = vmatpush1.msra.mxu0 0.0
  %692 = vmatprep.subr.mxu0 0.0
  %693 = vmatpush1.msra.mxu0 0.0
  %694 = vmatprep.subr.mxu0 0.0
  %695 = vmatpush1.msra.mxu0 0.0
  %696 = vmatprep.subr.mxu0 0.0
  %697 = vmatpush1.msra.mxu0 0.0
  %698 = vmatprep.subr.mxu0 0.0
  %699 = vmatpush1.msra.mxu0 0.0
  %700 = vmatprep.subr.mxu0 0.0
  %701 = vmatpush1.msra.mxu0 0.0
  %702 = vmatprep.subr.mxu0 0.0
  %703 = vmatpush1.msra.mxu0 0.0
  %704 = vmatprep.subr.mxu0 0.0
  %705 = vmatpush1.msra.mxu0 0.0
  %706 = vmatprep.subr.mxu0 0.0
  %707 = vmatpush1.msra.mxu0 0.0
  %708 = vmatprep.subr.mxu0 0.0
  %709 = vmatpush1.msra.mxu0 0.0
  %710 = vmatprep.subr.mxu0 0.0
  %711 = vmatpush1.msra.mxu0 0.0
  %712 = vmatprep.subr.mxu0 0.0
  %713 = vmatpush1.msra.mxu0 0.0
  %714 = vmatprep.subr.mxu0 0.0
  %715 = vmatpush1.msra.mxu0 0.0
  %716 = vmatprep.subr.mxu0 0.0
  %717 = vmatpush1.msra.mxu0 0.0
  %718 = vmatprep.subr.mxu0 0.0
  %719 = vmatpush1.msra.mxu0 0.0
  %720 = vmatprep.subr.mxu0 0.0
  %721 = vmatpush1.msra.mxu0 0.0
  %722 = vmatprep.subr.mxu0 0.0
  %723 = vmatpush1.msra.mxu0 0.0
  %724 = vmatprep.subr.mxu0 0.0
  %725 = vmatpush1.msra.mxu0 0.0
  %726 = vmatprep.subr.mxu0 0.0
  %727 = vmatpush1.msra.mxu0 0.0
  %728 = vmatprep.mubr.f32.mxu0 0.0
  %729 = vmatmul.mubr.f32.gmra.mrb[0].mxu0 %v500
  %v730 = vpop.f32.mrb[0].mxu0
  %v731 = vadd.f32 %v460, %v730
  %v732 = vpop.f32.mrb[0].mxu0
  %733 = vmatprep.mubr.f32.mxu0 0.0
  %734 = vmatmul.mubr.f32.gmra.mrb[0].mxu0 %v503
  %v735 = vpop.f32.mrb[0].mxu0
  %v736 = vadd.f32 %v464, %v735
  %v737 = vpop.f32.mrb[0].mxu0
  %738 = vmatprep.mubr.f32.mxu0 0.0
  %739 = vmatmul.mubr.f32.gmra.mrb[0].mxu0 %v506
  %v740 = vpop.f32.mrb[0].mxu0
  %v741 = vadd.f32 %v468, %v740
  %v742 = vpop.f32.mrb[0].mxu0
  %743 = vmatprep.mubr.f32.mxu0 0.0
  %744 = vmatmul.mubr.f32.gmra.mrb[0].mxu0 %v509
  %v745 = vpop.f32.mrb[0].mxu0
  %v746 = vadd.f32 %v472, %v745
  %v747 = vpop.f32.mrb[0].mxu0
  %748 = vmatprep.mubr.f32.mxu0 0.0
  %749 = vmatmul.mubr.f32.gmra.mrb[0].mxu0 %v512
  %v750 = vpop.f32.mrb[0].mxu0
  %v751 = vadd.f32 %v476, %v750
  %v752 = vpop.f32.mrb[0].mxu0
  %753 = vmatprep.mubr.f32.mxu0 0.0
  %754 = vmatmul.mubr.f32.gmra.mrb[0].mxu0 %v515
  %v755 = vpop.f32.mrb[0].mxu0
  %v756 = vadd.f32 %v480, %v755
  %v757 = vpop.f32.mrb[0].mxu0
  %758 = vmatprep.mubr.f32.mxu0 0.0
  %759 = vmatmul.mubr.f32.gmra.mrb[0].mxu0 %v518
  %v760 = vpop.f32.mrb[0].mxu0
  %v761 = vadd.f32 %v484, %v760
  %v762 = vpop.f32.mrb[0].mxu0
  %763 = vmatprep.mubr.f32.mxu0 0.0
  %764 = vmatmul.mubr.f32.gmra.mrb[0].mxu0 %v521
  %v765 = vpop.f32.mrb[0].mxu0
  %v766 = vadd.f32 %v488, %v765
  %v767 = vpop.f32.mrb[0].mxu0
  %768 = vmatprep.mubr.f32.mxu0 0.0
  %769 = vmatmul.mubr.f32.gmra.mrb[0].mxu0 %v524
  %v770 = vpop.f32.mrb[0].mxu0
  %v771 = vadd.f32 %v492, %v770
  %v772 = vpop.f32.mrb[0].mxu0
  %773 = vmatprep.mubr.f32.mxu0 0.0
  %774 = vmatmul.mubr.f32.gmra.mrb[0].mxu0 %v527
  %v775 = vpop.f32.mrb[0].mxu0
  %v776 = vadd.f32 %v496, %v775
  %v777 = vpop.f32.mrb[0].mxu0
  %778 = vdwg.mxu0
  %v779 = vmul.f32 %v731, 0.01
  %v780 = vmul.f32 %v736, 0.01
  %v781 = vmul.f32 %v741, 0.01
  %v782 = vmul.f32 %v746, 0.01
  %v783 = vmul.f32 %v751, 0.01
  %v784 = vmul.f32 %v756, 0.01
  %v785 = vmul.f32 %v761, 0.01
  %v786 = vmul.f32 %v766, 0.01
  %v787 = vmul.f32 %v771, 0.01
  %v788 = vmul.f32 %v776, 0.01
  %v789 = vmax.f32 %v731, %v779
  %v790 = vmax.f32 %v736, %v780
  %v791 = vmax.f32 %v741, %v781
  %v792 = vmax.f32 %v746, %v782
  %v793 = vmax.f32 %v751, %v783
  %v794 = vmax.f32 %v756, %v784
  %v795 = vmax.f32 %v761, %v785
  %v796 = vmax.f32 %v766, %v786
  %v797 = vmax.f32 %v771, %v787
  %v798 = vmax.f32 %v776, %v788
  %v799 = vld [vmem:[%s4] sm:$0xff]
  %v800 = vld [vmem:[%s4 + $0x8] sm:$0xff]
  %v801 = vld [vmem:[%s4 + $0x10] sm:$0xff]
  %v802 = vld [vmem:[%s4 + $0x18] sm:$0xff]
  %v803 = vld [vmem:[%s4 + $0x20] sm:$0xff]
  %804 = vset.pattern.permute.xlu0 2
  %805 = vperm.xlu0 %804, %v32
  %v806 = vpop.permute.xlu0 %805
  %808 = vset.pattern.permute.xlu0 2
  %809 = vperm.xlu0 %808, %v33
  %v810 = vpop.permute.xlu0 %809
  %812 = vset.pattern.permute.xlu0 2
  %813 = vperm.xlu0 %812, %v34
  %v814 = vpop.permute.xlu0 %813
  %816 = vset.pattern.permute.xlu0 2
  %817 = vperm.xlu0 %816, %v35
  %v818 = vpop.permute.xlu0 %817
  %820 = vset.pattern.permute.xlu0 2
  %821 = vperm.xlu0 %820, %v36
  %v822 = vpop.permute.xlu0 %821
  %v825 = vsel %vm498, %v799, 0
  %v828 = vsel %vm498, %v800, 0
  %v831 = vsel %vm498, %v801, 0
  %v834 = vsel %vm498, %v802, 0
  %v837 = vsel %vm498, %v803, 0
  %839 = vmatprep.subr.mxu0 0.0
  %840 = vmatpush1.msra.mxu0 %v654
  %841 = vmatprep.subr.mxu0 0.0
  %842 = vmatpush1.msra.mxu0 %v655
  %843 = vmatprep.subr.mxu0 0.0
  %844 = vmatpush1.msra.mxu0 %v656
  %845 = vmatprep.subr.mxu0 0.0
  %846 = vmatpush1.msra.mxu0 %v657
  %847 = vmatprep.subr.mxu0 0.0
  %848 = vmatpush1.msra.mxu0 %v658
  %849 = vmatprep.subr.mxu0 0.0
  %850 = vmatpush1.msra.mxu0 %v659
  %851 = vmatprep.subr.mxu0 0.0
  %852 = vmatpush1.msra.mxu0 %v660
  %853 = vmatprep.subr.mxu0 0.0
  %854 = vmatpush1.msra.mxu0 %v661
  %855 = vmatprep.subr.mxu0 0.0
  %856 = vmatpush1.msra.mxu0 %v662
  %857 = vmatprep.subr.mxu0 0.0
  %858 = vmatpush1.msra.mxu0 %v663
  %859 = vmatprep.subr.mxu0 0.0
  %860 = vmatpush1.msra.mxu0 0.0
  %861 = vmatprep.subr.mxu0 0.0
  %862 = vmatpush1.msra.mxu0 0.0
  %863 = vmatprep.subr.mxu0 0.0
  %864 = vmatpush1.msra.mxu0 0.0
  %865 = vmatprep.subr.mxu0 0.0
  %866 = vmatpush1.msra.mxu0 0.0
  %867 = vmatprep.subr.mxu0 0.0
  %868 = vmatpush1.msra.mxu0 0.0
  %869 = vmatprep.subr.mxu0 0.0
  %870 = vmatpush1.msra.mxu0 0.0
  %871 = vmatprep.subr.mxu0 0.0
  %872 = vmatpush1.msra.mxu0 0.0
  %873 = vmatprep.subr.mxu0 0.0
  %874 = vmatpush1.msra.mxu0 0.0
  %875 = vmatprep.subr.mxu0 0.0
  %876 = vmatpush1.msra.mxu0 0.0
  %877 = vmatprep.subr.mxu0 0.0
  %878 = vmatpush1.msra.mxu0 0.0
  %879 = vmatprep.subr.mxu0 0.0
  %880 = vmatpush1.msra.mxu0 0.0
  %881 = vmatprep.subr.mxu0 0.0
  %882 = vmatpush1.msra.mxu0 0.0
  %883 = vmatprep.subr.mxu0 0.0
  %884 = vmatpush1.msra.mxu0 0.0
  %885 = vmatprep.subr.mxu0 0.0
  %886 = vmatpush1.msra.mxu0 0.0
  %887 = vmatprep.subr.mxu0 0.0
  %888 = vmatpush1.msra.mxu0 0.0
  %889 = vmatprep.subr.mxu0 0.0
  %890 = vmatpush1.msra.mxu0 0.0
  %891 = vmatprep.subr.mxu0 0.0
  %892 = vmatpush1.msra.mxu0 0.0
  %893 = vmatprep.subr.mxu0 0.0
  %894 = vmatpush1.msra.mxu0 0.0
  %895 = vmatprep.subr.mxu0 0.0
  %896 = vmatpush1.msra.mxu0 0.0
  %897 = vmatprep.subr.mxu0 0.0
  %898 = vmatpush1.msra.mxu0 0.0
  %899 = vmatprep.subr.mxu0 0.0
  %900 = vmatpush1.msra.mxu0 0.0
  %901 = vmatprep.subr.mxu0 0.0
  %902 = vmatpush1.msra.mxu0 0.0
  %903 = vmatprep.mubr.f32.mxu0 0.0
  %904 = vmatmul.mubr.f32.gmra.mrb[0].mxu0 %v825
  %v905 = vpop.f32.mrb[0].mxu0
  %v906 = vadd.f32 %v806, %v905
  %v907 = vpop.f32.mrb[0].mxu0
  %908 = vmatprep.mubr.f32.mxu0 0.0
  %909 = vmatmul.mubr.f32.gmra.mrb[0].mxu0 %v828
  %v910 = vpop.f32.mrb[0].mxu0
  %v911 = vadd.f32 %v810, %v910
  %v912 = vpop.f32.mrb[0].mxu0
  %913 = vmatprep.mubr.f32.mxu0 0.0
  %914 = vmatmul.mubr.f32.gmra.mrb[0].mxu0 %v831
  %v915 = vpop.f32.mrb[0].mxu0
  %v916 = vadd.f32 %v814, %v915
  %v917 = vpop.f32.mrb[0].mxu0
  %918 = vmatprep.mubr.f32.mxu0 0.0
  %919 = vmatmul.mubr.f32.gmra.mrb[0].mxu0 %v834
  %v920 = vpop.f32.mrb[0].mxu0
  %v921 = vadd.f32 %v818, %v920
  %v922 = vpop.f32.mrb[0].mxu0
  %923 = vmatprep.mubr.f32.mxu0 0.0
  %924 = vmatmul.mubr.f32.gmra.mrb[0].mxu0 %v837
  %v925 = vpop.f32.mrb[0].mxu0
  %v926 = vadd.f32 %v822, %v925
  %v927 = vpop.f32.mrb[0].mxu0
  %928 = vdwg.mxu0
  %v929 = vmul.f32 %v906, 0.01
  %v930 = vmul.f32 %v911, 0.01
  %v931 = vmul.f32 %v916, 0.01
  %v932 = vmul.f32 %v921, 0.01
  %v933 = vmul.f32 %v926, 0.01
  %v934 = vmax.f32 %v906, %v929
  %v935 = vmax.f32 %v911, %v930
  %v936 = vmax.f32 %v916, %v931
  %v937 = vmax.f32 %v921, %v932
  %v938 = vmax.f32 %v926, %v933
  %939 = vmatprep.subr.mxu0 0.0
  %940 = vmatpush1.msra.mxu0 %v789
  %941 = vmatprep.subr.mxu0 0.0
  %942 = vmatpush1.msra.mxu0 %v790
  %943 = vmatprep.subr.mxu0 0.0
  %944 = vmatpush1.msra.mxu0 %v791
  %945 = vmatprep.subr.mxu0 0.0
  %946 = vmatpush1.msra.mxu0 %v792
  %947 = vmatprep.subr.mxu0 0.0
  %948 = vmatpush1.msra.mxu0 %v793
  %949 = vmatprep.subr.mxu0 0.0
  %950 = vmatpush1.msra.mxu0 %v794
  %951 = vmatprep.subr.mxu0 0.0
  %952 = vmatpush1.msra.mxu0 %v795
  %953 = vmatprep.subr.mxu0 0.0
  %954 = vmatpush1.msra.mxu0 %v796
  %955 = vmatprep.subr.mxu0 0.0
  %956 = vmatpush1.msra.mxu0 %v797
  %957 = vmatprep.subr.mxu0 0.0
  %958 = vmatpush1.msra.mxu0 %v798
  %959 = vmatprep.subr.mxu0 0.0
  %960 = vmatpush1.msra.mxu0 0.0
  %961 = vmatprep.subr.mxu0 0.0
  %962 = vmatpush1.msra.mxu0 0.0
  %963 = vmatprep.subr.mxu0 0.0
  %964 = vmatpush1.msra.mxu0 0.0
  %965 = vmatprep.subr.mxu0 0.0
  %966 = vmatpush1.msra.mxu0 0.0
  %967 = vmatprep.subr.mxu0 0.0
  %968 = vmatpush1.msra.mxu0 0.0
  %969 = vmatprep.subr.mxu0 0.0
  %970 = vmatpush1.msra.mxu0 0.0
  %971 = vmatprep.subr.mxu0 0.0
  %972 = vmatpush1.msra.mxu0 0.0
  %973 = vmatprep.subr.mxu0 0.0
  %974 = vmatpush1.msra.mxu0 0.0
  %975 = vmatprep.subr.mxu0 0.0
  %976 = vmatpush1.msra.mxu0 0.0
  %977 = vmatprep.subr.mxu0 0.0
  %978 = vmatpush1.msra.mxu0 0.0
  %979 = vmatprep.subr.mxu0 0.0
  %980 = vmatpush1.msra.mxu0 0.0
  %981 = vmatprep.subr.mxu0 0.0
  %982 = vmatpush1.msra.mxu0 0.0
  %983 = vmatprep.subr.mxu0 0.0
  %984 = vmatpush1.msra.mxu0 0.0
  %985 = vmatprep.subr.mxu0 0.0
  %986 = vmatpush1.msra.mxu0 0.0
  %987 = vmatprep.subr.mxu0 0.0
  %988 = vmatpush1.msra.mxu0 0.0
  %989 = vmatprep.subr.mxu0 0.0
  %990 = vmatpush1.msra.mxu0 0.0
  %991 = vmatprep.subr.mxu0 0.0
  %992 = vmatpush1.msra.mxu0 0.0
  %993 = vmatprep.subr.mxu0 0.0
  %994 = vmatpush1.msra.mxu0 0.0
  %995 = vmatprep.subr.mxu0 0.0
  %996 = vmatpush1.msra.mxu0 0.0
  %997 = vmatprep.subr.mxu0 0.0
  %998 = vmatpush1.msra.mxu0 0.0
  %999 = vmatprep.subr.mxu0 0.0
  %1000 = vmatpush1.msra.mxu0 0.0
  %1001 = vmatprep.subr.mxu0 0.0
  %1002 = vmatpush1.msra.mxu0 0.0
  %1003 = vmatprep.mubr.f32.mxu0 0.0
  %1004 = vmatmul.mubr.f32.gmra.mrb[0].mxu0 %v825
  %v1005 = vpop.f32.mrb[0].mxu0
  %v1006 = vadd.f32 %v806, %v1005
  %v1007 = vpop.f32.mrb[0].mxu0
  %1008 = vmatprep.mubr.f32.mxu0 0.0
  %1009 = vmatmul.mubr.f32.gmra.mrb[0].mxu0 %v828
  %v1010 = vpop.f32.mrb[0].mxu0
  %v1011 = vadd.f32 %v810, %v1010
  %v1012 = vpop.f32.mrb[0].mxu0
  %1013 = vmatprep.mubr.f32.mxu0 0.0
  %1014 = vmatmul.mubr.f32.gmra.mrb[0].mxu0 %v831
  %v1015 = vpop.f32.mrb[0].mxu0
  %v1016 = vadd.f32 %v814, %v1015
  %v1017 = vpop.f32.mrb[0].mxu0
  %1018 = vmatprep.mubr.f32.mxu0 0.0
  %1019 = vmatmul.mubr.f32.gmra.mrb[0].mxu0 %v834
  %v1020 = vpop.f32.mrb[0].mxu0
  %v1021 = vadd.f32 %v818, %v1020
  %v1022 = vpop.f32.mrb[0].mxu0
  %1023 = vmatprep.mubr.f32.mxu0 0.0
  %1024 = vmatmul.mubr.f32.gmra.mrb[0].mxu0 %v837
  %v1025 = vpop.f32.mrb[0].mxu0
  %v1026 = vadd.f32 %v822, %v1025
  %v1027 = vpop.f32.mrb[0].mxu0
  %1028 = vdwg.mxu0
  %v1029 = vmul.f32 %v1006, 0.01
  %v1030 = vmul.f32 %v1011, 0.01
  %v1031 = vmul.f32 %v1016, 0.01
  %v1032 = vmul.f32 %v1021, 0.01
  %v1033 = vmul.f32 %v1026, 0.01
  %v1034 = vmax.f32 %v1006, %v1029
  %v1035 = vmax.f32 %v1011, %v1030
  %v1036 = vmax.f32 %v1016, %v1031
  %v1037 = vmax.f32 %v1021, %v1032
  %v1038 = vmax.f32 %v1026, %v1033
  %v1039 = vld [vmem:[%s5] sm:$0xff]
  %v1040 = vld [vmem:[%s5 + $0x8] sm:$0xff]
  %v1041 = vld [vmem:[%s5 + $0x10] sm:$0xf]
  %1042 = vset.pattern.permute.xlu0 3
  %1043 = vperm.xlu0 %1042, %v32
  %v1044 = vpop.permute.xlu0 %1043
  %1046 = vset.pattern.permute.xlu0 3
  %1047 = vperm.xlu0 %1046, %v33
  %v1048 = vpop.permute.xlu0 %1047
  %1051 = vset.pattern.permute.xlu0 3
  %1052 = vperm.xlu0 %1051, %v42
  %v1053 = vpop.permute.xlu0 %1052
  %vm1055 = vcmask 326656
  %v1057 = vsel %vm1055, %v1039, 0
  %v1060 = vsel %vm1055, %v1040, 0
  %v1063 = vsel %vm1055, %v1041, 0
  %1065 = vmatprep.subr.mxu0 0.0
  %1066 = vmatpush1.msra.mxu0 %v934
  %1067 = vmatprep.subr.mxu0 0.0
  %1068 = vmatpush1.msra.mxu0 %v935
  %1069 = vmatprep.subr.mxu0 0.0
  %1070 = vmatpush1.msra.mxu0 %v936
  %1071 = vmatprep.subr.mxu0 0.0
  %1072 = vmatpush1.msra.mxu0 %v937
  %1073 = vmatprep.subr.mxu0 0.0
  %1074 = vmatpush1.msra.mxu0 %v938
  %1075 = vmatprep.subr.mxu0 0.0
  %1076 = vmatpush1.msra.mxu0 0.0
  %1077 = vmatprep.subr.mxu0 0.0
  %1078 = vmatpush1.msra.mxu0 0.0
  %1079 = vmatprep.subr.mxu0 0.0
  %1080 = vmatpush1.msra.mxu0 0.0
  %1081 = vmatprep.subr.mxu0 0.0
  %1082 = vmatpush1.msra.mxu0 0.0
  %1083 = vmatprep.subr.mxu0 0.0
  %1084 = vmatpush1.msra.mxu0 0.0
  %1085 = vmatprep.subr.mxu0 0.0
  %1086 = vmatpush1.msra.mxu0 0.0
  %1087 = vmatprep.subr.mxu0 0.0
  %1088 = vmatpush1.msra.mxu0 0.0
  %1089 = vmatprep.subr.mxu0 0.0
  %1090 = vmatpush1.msra.mxu0 0.0
  %1091 = vmatprep.subr.mxu0 0.0
  %1092 = vmatpush1.msra.mxu0 0.0
  %1093 = vmatprep.subr.mxu0 0.0
  %1094 = vmatpush1.msra.mxu0 0.0
  %1095 = vmatprep.subr.mxu0 0.0
  %1096 = vmatpush1.msra.mxu0 0.0
  %1097 = vmatprep.subr.mxu0 0.0
  %1098 = vmatpush1.msra.mxu0 0.0
  %1099 = vmatprep.subr.mxu0 0.0
  %1100 = vmatpush1.msra.mxu0 0.0
  %1101 = vmatprep.subr.mxu0 0.0
  %1102 = vmatpush1.msra.mxu0 0.0
  %1103 = vmatprep.subr.mxu0 0.0
  %1104 = vmatpush1.msra.mxu0 0.0
  %1105 = vmatprep.subr.mxu0 0.0
  %1106 = vmatpush1.msra.mxu0 0.0
  %1107 = vmatprep.subr.mxu0 0.0
  %1108 = vmatpush1.msra.mxu0 0.0
  %1109 = vmatprep.subr.mxu0 0.0
  %1110 = vmatpush1.msra.mxu0 0.0
  %1111 = vmatprep.subr.mxu0 0.0
  %1112 = vmatpush1.msra.mxu0 0.0
  %1113 = vmatprep.subr.mxu0 0.0
  %1114 = vmatpush1.msra.mxu0 0.0
  %1115 = vmatprep.subr.mxu0 0.0
  %1116 = vmatpush1.msra.mxu0 0.0
  %1117 = vmatprep.subr.mxu0 0.0
  %1118 = vmatpush1.msra.mxu0 0.0
  %1119 = vmatprep.subr.mxu0 0.0
  %1120 = vmatpush1.msra.mxu0 0.0
  %1121 = vmatprep.subr.mxu0 0.0
  %1122 = vmatpush1.msra.mxu0 0.0
  %1123 = vmatprep.subr.mxu0 0.0
  %1124 = vmatpush1.msra.mxu0 0.0
  %1125 = vmatprep.subr.mxu0 0.0
  %1126 = vmatpush1.msra.mxu0 0.0
  %1127 = vmatprep.subr.mxu0 0.0
  %1128 = vmatpush1.msra.mxu0 0.0
  %1129 = vmatprep.mubr.f32.mxu0 0.0
  %1130 = vmatmul.mubr.f32.gmra.mrb[0].mxu0 %v1057
  %v1131 = vpop.f32.mrb[0].mxu0
  %v1132 = vadd.f32 %v1044, %v1131
  %v1133 = vpop.f32.mrb[0].mxu0
  %1134 = vmatprep.mubr.f32.mxu0 0.0
  %1135 = vmatmul.mubr.f32.gmra.mrb[0].mxu0 %v1060
  %v1136 = vpop.f32.mrb[0].mxu0
  %v1137 = vadd.f32 %v1048, %v1136
  %v1138 = vpop.f32.mrb[0].mxu0
  %1139 = vmatprep.mubr.f32.mxu0 0.0
  %1140 = vmatmul.mubr.f32.gmra.mrb[0].mxu0 %v1063
  %v1141 = vpop.f32.mrb[0].mxu0
  %v1142 = vadd.f32 %v1053, %v1141
  %v1143 = vpop.f32.mrb[0].mxu0
  %1144 = vdwg.mxu0
  %v1145 = vmul.f32 %v1132, 0.01
  %v1146 = vmul.f32 %v1137, 0.01
  %v1147 = vmul.f32 %v1142, 0.01
  %v1148 = vmax.f32 %v1132, %v1145
  %v1149 = vmax.f32 %v1137, %v1146
  %v1150 = vmax.f32 %v1142, %v1147
  %1151 = vmatprep.subr.mxu0 0.0
  %1152 = vmatpush1.msra.mxu0 %v1034
  %1153 = vmatprep.subr.mxu0 0.0
  %1154 = vmatpush1.msra.mxu0 %v1035
  %1155 = vmatprep.subr.mxu0 0.0
  %1156 = vmatpush1.msra.mxu0 %v1036
  %1157 = vmatprep.subr.mxu0 0.0
  %1158 = vmatpush1.msra.mxu0 %v1037
  %1159 = vmatprep.subr.mxu0 0.0
  %1160 = vmatpush1.msra.mxu0 %v1038
  %1161 = vmatprep.subr.mxu0 0.0
  %1162 = vmatpush1.msra.mxu0 0.0
  %1163 = vmatprep.subr.mxu0 0.0
  %1164 = vmatpush1.msra.mxu0 0.0
  %1165 = vmatprep.subr.mxu0 0.0
  %1166 = vmatpush1.msra.mxu0 0.0
  %1167 = vmatprep.subr.mxu0 0.0
  %1168 = vmatpush1.msra.mxu0 0.0
  %1169 = vmatprep.subr.mxu0 0.0
  %1170 = vmatpush1.msra.mxu0 0.0
  %1171 = vmatprep.subr.mxu0 0.0
  %1172 = vmatpush1.msra.mxu0 0.0
  %1173 = vmatprep.subr.mxu0 0.0
  %1174 = vmatpush1.msra.mxu0 0.0
  %1175 = vmatprep.subr.mxu0 0.0
  %1176 = vmatpush1.msra.mxu0 0.0
  %1177 = vmatprep.subr.mxu0 0.0
  %1178 = vmatpush1.msra.mxu0 0.0
  %1179 = vmatprep.subr.mxu0 0.0
  %1180 = vmatpush1.msra.mxu0 0.0
  %1181 = vmatprep.subr.mxu0 0.0
  %1182 = vmatpush1.msra.mxu0 0.0
  %1183 = vmatprep.subr.mxu0 0.0
  %1184 = vmatpush1.msra.mxu0 0.0
  %1185 = vmatprep.subr.mxu0 0.0
  %1186 = vmatpush1.msra.mxu0 0.0
  %1187 = vmatprep.subr.mxu0 0.0
  %1188 = vmatpush1.msra.mxu0 0.0
  %1189 = vmatprep.subr.mxu0 0.0
  %1190 = vmatpush1.msra.mxu0 0.0
  %1191 = vmatprep.subr.mxu0 0.0
  %1192 = vmatpush1.msra.mxu0 0.0
  %1193 = vmatprep.subr.mxu0 0.0
  %1194 = vmatpush1.msra.mxu0 0.0
  %1195 = vmatprep.subr.mxu0 0.0
  %1196 = vmatpush1.msra.mxu0 0.0
  %1197 = vmatprep.subr.mxu0 0.0
  %1198 = vmatpush1.msra.mxu0 0.0
  %1199 = vmatprep.subr.mxu0 0.0
  %1200 = vmatpush1.msra.mxu0 0.0
  %1201 = vmatprep.subr.mxu0 0.0
  %1202 = vmatpush1.msra.mxu0 0.0
  %1203 = vmatprep.subr.mxu0 0.0
  %1204 = vmatpush1.msra.mxu0 0.0
  %1205 = vmatprep.subr.mxu0 0.0
  %1206 = vmatpush1.msra.mxu0 0.0
  %1207 = vmatprep.subr.mxu0 0.0
  %1208 = vmatpush1.msra.mxu0 0.0
  %1209 = vmatprep.subr.mxu0 0.0
  %1210 = vmatpush1.msra.mxu0 0.0
  %1211 = vmatprep.subr.mxu0 0.0
  %1212 = vmatpush1.msra.mxu0 0.0
  %1213 = vmatprep.subr.mxu0 0.0
  %1214 = vmatpush1.msra.mxu0 0.0
  %1215 = vmatprep.mubr.f32.mxu0 0.0
  %1216 = vmatmul.mubr.f32.gmra.mrb[0].mxu0 %v1057
  %v1217 = vpop.f32.mrb[0].mxu0
  %v1218 = vadd.f32 %v1044, %v1217
  %v1219 = vpop.f32.mrb[0].mxu0
  %1220 = vmatprep.mubr.f32.mxu0 0.0
  %1221 = vmatmul.mubr.f32.gmra.mrb[0].mxu0 %v1060
  %v1222 = vpop.f32.mrb[0].mxu0
  %v1223 = vadd.f32 %v1048, %v1222
  %v1224 = vpop.f32.mrb[0].mxu0
  %1225 = vmatprep.mubr.f32.mxu0 0.0
  %1226 = vmatmul.mubr.f32.gmra.mrb[0].mxu0 %v1063
  %v1227 = vpop.f32.mrb[0].mxu0
  %v1228 = vadd.f32 %v1053, %v1227
  %v1229 = vpop.f32.mrb[0].mxu0
  %1230 = vdwg.mxu0
  %v1231 = vmul.f32 %v1218, 0.01
  %v1232 = vmul.f32 %v1223, 0.01
  %v1233 = vmul.f32 %v1228, 0.01
  %v1234 = vmax.f32 %v1218, %v1231
  %v1235 = vmax.f32 %v1223, %v1232
  %v1236 = vmax.f32 %v1228, %v1233
  %v1237 = vsub.f32 %v1148, %v1234
  %v1238 = vsub.f32 %v1149, %v1235
  %v1239 = vsub.f32 %v1150, %v1236
  %v1240 = vld [vmem:[%s6] sm:$0x1]
  %vm1241 = vcmask 162816
  %v1243 = vsel %vm1241, %v1240, 0
  %vm1245 = vcmask 1043456
  %v1247 = vsel %vm1245, %v1239, 0
  %1249 = vmatprep.subr.mxu0 0.0
  %1250 = vmatpush1.msra.mxu0 %v1237
  %1251 = vmatprep.subr.mxu0 0.0
  %1252 = vmatpush1.msra.mxu0 %v1238
  %1253 = vmatprep.subr.mxu0 0.0
  %1254 = vmatpush1.msra.mxu0 %v1247
  %1255 = vmatprep.subr.mxu0 0.0
  %1256 = vmatpush1.msra.mxu0 0.0
  %1257 = vmatprep.subr.mxu0 0.0
  %1258 = vmatpush1.msra.mxu0 0.0
  %1259 = vmatprep.subr.mxu0 0.0
  %1260 = vmatpush1.msra.mxu0 0.0
  %1261 = vmatprep.subr.mxu0 0.0
  %1262 = vmatpush1.msra.mxu0 0.0
  %1263 = vmatprep.subr.mxu0 0.0
  %1264 = vmatpush1.msra.mxu0 0.0
  %1265 = vmatprep.subr.mxu0 0.0
  %1266 = vmatpush1.msra.mxu0 0.0
  %1267 = vmatprep.subr.mxu0 0.0
  %1268 = vmatpush1.msra.mxu0 0.0
  %1269 = vmatprep.subr.mxu0 0.0
  %1270 = vmatpush1.msra.mxu0 0.0
  %1271 = vmatprep.subr.mxu0 0.0
  %1272 = vmatpush1.msra.mxu0 0.0
  %1273 = vmatprep.subr.mxu0 0.0
  %1274 = vmatpush1.msra.mxu0 0.0
  %1275 = vmatprep.subr.mxu0 0.0
  %1276 = vmatpush1.msra.mxu0 0.0
  %1277 = vmatprep.subr.mxu0 0.0
  %1278 = vmatpush1.msra.mxu0 0.0
  %1279 = vmatprep.subr.mxu0 0.0
  %1280 = vmatpush1.msra.mxu0 0.0
  %1281 = vmatprep.subr.mxu0 0.0
  %1282 = vmatpush1.msra.mxu0 0.0
  %1283 = vmatprep.subr.mxu0 0.0
  %1284 = vmatpush1.msra.mxu0 0.0
  %1285 = vmatprep.subr.mxu0 0.0
  %1286 = vmatpush1.msra.mxu0 0.0
  %1287 = vmatprep.subr.mxu0 0.0
  %1288 = vmatpush1.msra.mxu0 0.0
  %1289 = vmatprep.subr.mxu0 0.0
  %1290 = vmatpush1.msra.mxu0 0.0
  %1291 = vmatprep.subr.mxu0 0.0
  %1292 = vmatpush1.msra.mxu0 0.0
  %1293 = vmatprep.subr.mxu0 0.0
  %1294 = vmatpush1.msra.mxu0 0.0
  %1295 = vmatprep.subr.mxu0 0.0
  %1296 = vmatpush1.msra.mxu0 0.0
  %1297 = vmatprep.subr.mxu0 0.0
  %1298 = vmatpush1.msra.mxu0 0.0
  %1299 = vmatprep.subr.mxu0 0.0
  %1300 = vmatpush1.msra.mxu0 0.0
  %1301 = vmatprep.subr.mxu0 0.0
  %1302 = vmatpush1.msra.mxu0 0.0
  %1303 = vmatprep.subr.mxu0 0.0
  %1304 = vmatpush1.msra.mxu0 0.0
  %1305 = vmatprep.subr.mxu0 0.0
  %1306 = vmatpush1.msra.mxu0 0.0
  %1307 = vmatprep.subr.mxu0 0.0
  %1308 = vmatpush1.msra.mxu0 0.0
  %1309 = vmatprep.subr.mxu0 0.0
  %1310 = vmatpush1.msra.mxu0 0.0
  %1311 = vmatprep.subr.mxu0 0.0
  %1312 = vmatpush1.msra.mxu0 0.0
  %1313 = vmatprep.mubr.f32.mxu0 0.0
  %1314 = vmatmul.mubr.f32.gmra.mrb[0].mxu0 %v1243
  %v1315 = vpop.f32.mrb[0].mxu0
  %v1316 = vadd.f32 0.0, %v1315
  %v1317 = vpop.f32.mrb[0].mxu0
  %1318 = vdwg.mxu0
  %1319 = vst [vmem:[%s8] sm:$0x1] %v1316
  // Predicated region
  $region34: #{network_forward.1} parent=0 // pred_check
    _
  $region35: #{network_forward.1} parent=0 // pred_check_branch
    %1321 = sbr.rel (0) target = $region37
  $region36: #{network_forward.1} parent=0 // pred_region
    _
  $region37: #{network_forward.1} parent=0 // pred_fallthru
    _
  // Predicated region
  $region38: #{network_forward.1} parent=0 // pred_check
    _
  $region39: #{network_forward.1} parent=0 // pred_check_branch
    %1323 = sbr.rel (0) target = $region41
  $region40: #{network_forward.1} parent=0 // pred_region
    _
  $region41: #{network_forward.1} parent=0 // pred_fallthru
    _

</llo_original>
